<compile_context>
chip_gen: v7x
topology: tpu7x:2x2x1
jax: 0.10.0
libtpu: 0.0.40
codegen_flags: <defaults>
</compile_context>

<pallas_src>
import functools

import jax
import jax.numpy as jnp
from jax.experimental import pallas as pl
from jax.experimental.pallas import tpu as pltpu

_LANE = 128


def _round_up(n, m):
    return ((n + m - 1) // m) * m


def _layernorm_kernel(x_ref, w_ref, b_ref, o_ref, *, eps, h_valid, h_pad):
    # x_ref: (row_tile, h_pad) block of rows; w_ref/b_ref: (1, h_pad) params.
    # Only the first h_valid lanes are real data; trailing lanes are zero pad.
    x = x_ref[...].astype(jnp.float32)
    inv_h = 1.0 / float(h_valid)

    if h_valid != h_pad:  # static branch: mask padded lanes out of the stats
        lane = jax.lax.broadcasted_iota(jnp.int32, x.shape, dimension=x.ndim - 1)
        x = jnp.where(lane < h_valid, x, 0.0)

    # One pass over the lanes: sum and sum-of-squares together (fewer XLU passes).
    u = jnp.sum(x, axis=-1, keepdims=True) * inv_h
    ex2 = jnp.sum(x * x, axis=-1, keepdims=True) * inv_h
    var = jnp.maximum(ex2 - u * u, 0.0)

    inv = jax.lax.rsqrt(var + eps)  # EUP slot: effectively free in a mem-bound kernel
    y = (x - u) * inv

    w = w_ref[...].astype(jnp.float32)  # (1, h_pad) broadcasts over rows
    b = b_ref[...].astype(jnp.float32)  # padded lanes of w/b are zero -> padded out = 0
    o_ref[...] = (w * y + b).astype(o_ref.dtype)


def _pick_row_tile(rows, h_pad, dtype_size, budget_bytes=48 << 20, max_tile=1024):
    """Largest row tile (multiple of 8 f32 / 16 bf16) whose double-buffered
    in+out blocks plus ~2 f32 block temporaries fit the VMEM budget."""
    granule = 8 if dtype_size >= 4 else 16
    per_row = h_pad * (4 * dtype_size + 2 * 4)  # 2x in + 2x out bufs + ~2 f32 temps
    fit = max(budget_bytes // per_row, granule)
    tile = min(max_tile, int(fit), _round_up(rows, granule))
    tile = max((tile // granule) * granule, granule)
    return tile


def bert_layer_norm(x, weight, bias, eps=1e-12, row_tile=None):
    """x: (..., H). weight, bias: (H,). Returns same shape/dtype as x."""
    orig_shape = x.shape
    H = orig_shape[-1]
    x2 = x.reshape(-1, H)
    R = x2.shape[0]
    dtype_size = jnp.dtype(x.dtype).itemsize

    # Lane-dense hidden dim: pad H to a multiple of 128 so output stores are
    # unmasked full-vreg writes. BERT's H=768/1024 already satisfies this.
    H_pad = max(_round_up(H, _LANE), _LANE)
    if H_pad != H:
        x2 = jnp.pad(x2, ((0, 0), (0, H_pad - H)))
        weight = jnp.pad(weight, (0, H_pad - H))
        bias = jnp.pad(bias, (0, H_pad - H))

    if row_tile is None:
        row_tile = _pick_row_tile(R, H_pad, dtype_size)

    # Pad rows to a multiple of row_tile (rows are independent; padded rows are
    # all-zero -> finite outputs, sliced off below). Only copies when needed.
    R_pad = _round_up(R, row_tile)
    if R_pad != R:
        x2 = jnp.pad(x2, ((0, R_pad - R), (0, 0)))

    w2 = weight.reshape(1, H_pad)
    b2 = bias.reshape(1, H_pad)

    grid = (R_pad // row_tile,)

    # Explicit VMEM budget: 2x(in + out) double buffers + f32 temporaries + params.
    block_elems = row_tile * H_pad
    vmem_est = block_elems * (4 * dtype_size + 2 * 4) + 4 * H_pad * 4
    vmem_limit = int(min(max(vmem_est * 5 // 4 + (1 << 20), 16 << 20), 60 << 20))

    kernel = functools.partial(_layernorm_kernel, eps=eps, h_valid=H, h_pad=H_pad)

    out = pl.pallas_call(
        kernel,
        out_shape=jax.ShapeDtypeStruct((R_pad, H_pad), x.dtype),
        grid_spec=pltpu.PrefetchScalarGridSpec(
            num_scalar_prefetch=0,
            grid=grid,
            in_specs=[
                pl.BlockSpec((row_tile, H_pad), lambda i: (i, 0)),
                pl.BlockSpec((1, H_pad), lambda i: (0, 0)),
                pl.BlockSpec((1, H_pad), lambda i: (0, 0)),
            ],
            out_specs=pl.BlockSpec((row_tile, H_pad), lambda i: (i, 0)),
        ),
        compiler_params=pltpu.CompilerParams(
            dimension_semantics=("parallel",),  # row axis shards across TCs on v7x
            vmem_limit_bytes=vmem_limit,
        ),
    )(x2, w2, b2)

    out = out[:R, :H]
    return out.reshape(orig_shape)


def _reference(x, weight, bias, eps=1e-12):
    xf = x.astype(jnp.float32)
    u = jnp.mean(xf, axis=-1, keepdims=True)
    s = jnp.mean((xf - u) ** 2, axis=-1, keepdims=True)
    xn = (xf - u) / jnp.sqrt(s + eps)
    return (weight * xn + bias).astype(x.dtype)


if __name__ == "__main__":
    key = jax.random.PRNGKey(0)

    # Small demo shape matching the module's (batch, seq, hidden) usage.
    batch, seq, hidden = 2, 8, 32
    x = jax.random.normal(key, (batch, seq, hidden), dtype=jnp.float32)
    # Matches nn.Parameter(torch.ones(hidden)) / torch.zeros(hidden) init.
    weight = jnp.ones((hidden,), dtype=jnp.float32)
    bias = jnp.zeros((hidden,), dtype=jnp.float32)

    y = bert_layer_norm(x, weight, bias, eps=1e-12)
    y = jax.block_until_ready(y)
    y_ref = _reference(x, weight, bias, eps=1e-12)
    assert y.shape == x.shape and y.dtype == x.dtype
    assert jnp.allclose(y, y_ref, atol=1e-5, rtol=1e-5), "mismatch vs reference (H=32)"

    # Representative lane-dense BERT-ish shape (H multiple of 128, ragged rows).
    k1, k2, k3 = jax.random.split(key, 3)
    xb = jax.random.normal(k1, (2, 100, 768), dtype=jnp.float32)
    wb = 1.0 + 0.1 * jax.random.normal(k2, (768,), dtype=jnp.float32)
    bb = 0.1 * jax.random.normal(k3, (768,), dtype=jnp.float32)
    yb = jax.block_until_ready(bert_layer_norm(xb, wb, bb, eps=1e-12))
    yb_ref = _reference(xb, wb, bb, eps=1e-12)
    assert yb.shape == xb.shape and yb.dtype == xb.dtype
    assert jnp.allclose(yb, yb_ref, atol=1e-5, rtol=1e-5), "mismatch vs reference (H=768)"

    print("KERNEL_OK")
</pallas_src>

<mosaic_0001>
module attributes {stable_mosaic.version = 11 : i64} {
  func.func @_layernorm_kernel(%arg0: i32, %arg1: memref<16x128xf32, #tpu.memory_space<vmem>>, %arg2: memref<1x128xf32, #tpu.memory_space<vmem>>, %arg3: memref<1x128xf32, #tpu.memory_space<vmem>>, %arg4: memref<16x128xf32, #tpu.memory_space<vmem>>) attributes {dimension_semantics = [#tpu.dimension_semantics<parallel>], iteration_bounds = array<i64: 1>, scalar_prefetch = 0 : i64, scratch_operands = 0 : i64, tpu.core_type = #tpu.core_type<tc>, window_params = [{transform_indices = @transform_0, window_bounds = array<i64: 16, 128>}, {pipeline_mode = #tpu.pipeline_mode<synchronous>, transform_indices = @transform_1, window_bounds = array<i64: 1, 128>}, {pipeline_mode = #tpu.pipeline_mode<synchronous>, transform_indices = @transform_2, window_bounds = array<i64: 1, 128>}, {transform_indices = @transform_3, window_bounds = array<i64: 16, 128>}]} {
    %c0 = arith.constant 0 : index
    %c0_0 = arith.constant 0 : index
    %0 = vector.load %arg1[%c0, %c0_0] : memref<16x128xf32, #tpu.memory_space<vmem>>, vector<16x128xf32>
    %1 = tpu.iota {dimensions = array<i32: 1>} : vector<16x128xi32>
    %c32_i32 = arith.constant 32 : i32
    %2 = vector.broadcast %c32_i32 : i32 to vector<16x128xi32>
    %3 = arith.cmpi slt, %1, %2 : vector<16x128xi32>
    %cst = arith.constant 0.000000e+00 : f32
    %4 = vector.broadcast %cst : f32 to vector<16x128xf32>
    %5 = arith.select %3, %0, %4 : vector<16x128xi1>, vector<16x128xf32>
    %cst_1 = arith.constant dense<0.000000e+00> : vector<16xf32>
    %6 = vector.multi_reduction <add>, %5, %cst_1 [1] : vector<16x128xf32> to vector<16xf32>
    %7 = vector.shape_cast %6 : vector<16xf32> to vector<16x1xf32>
    %cst_2 = arith.constant 3.125000e-02 : f32
    %8 = vector.broadcast %cst_2 : f32 to vector<16x1xf32>
    %9 = arith.mulf %7, %8 : vector<16x1xf32>
    %10 = arith.mulf %5, %5 : vector<16x128xf32>
    %cst_3 = arith.constant dense<0.000000e+00> : vector<16xf32>
    %11 = vector.multi_reduction <add>, %10, %cst_3 [1] : vector<16x128xf32> to vector<16xf32>
    %12 = vector.shape_cast %11 : vector<16xf32> to vector<16x1xf32>
    %cst_4 = arith.constant 3.125000e-02 : f32
    %13 = vector.broadcast %cst_4 : f32 to vector<16x1xf32>
    %14 = arith.mulf %12, %13 : vector<16x1xf32>
    %15 = arith.mulf %9, %9 : vector<16x1xf32>
    %16 = arith.subf %14, %15 : vector<16x1xf32>
    %cst_5 = arith.constant 0.000000e+00 : f32
    %17 = vector.broadcast %cst_5 : f32 to vector<16x1xf32>
    %18 = arith.maximumf %16, %17 : vector<16x1xf32>
    %cst_6 = arith.constant 9.99999996E-13 : f32
    %19 = vector.broadcast %cst_6 : f32 to vector<16x1xf32>
    %20 = arith.addf %18, %19 : vector<16x1xf32>
    %21 = math.rsqrt %20 : vector<16x1xf32>
    %22 = vector.broadcast %9 : vector<16x1xf32> to vector<16x128xf32>
    %23 = arith.subf %5, %22 : vector<16x128xf32>
    %24 = vector.broadcast %21 : vector<16x1xf32> to vector<16x128xf32>
    %25 = arith.mulf %23, %24 : vector<16x128xf32>
    %c0_7 = arith.constant 0 : index
    %c0_8 = arith.constant 0 : index
    %26 = vector.load %arg2[%c0_7, %c0_8] : memref<1x128xf32, #tpu.memory_space<vmem>>, vector<1x128xf32>
    %c0_9 = arith.constant 0 : index
    %c0_10 = arith.constant 0 : index
    %27 = vector.load %arg3[%c0_9, %c0_10] : memref<1x128xf32, #tpu.memory_space<vmem>>, vector<1x128xf32>
    %28 = vector.broadcast %26 : vector<1x128xf32> to vector<16x128xf32>
    %29 = arith.mulf %28, %25 : vector<16x128xf32>
    %30 = vector.broadcast %27 : vector<1x128xf32> to vector<16x128xf32>
    %31 = arith.addf %29, %30 : vector<16x128xf32>
    %c0_11 = arith.constant 0 : index
    %c0_12 = arith.constant 0 : index
    %32 = vector.load %arg4[%c0_11, %c0_12] : memref<16x128xf32, #tpu.memory_space<vmem>>, vector<16x128xf32>
    tpu.vector_store %arg4[%c0_11, %c0_12], %31 {strides = array<i32>} : memref<16x128xf32, #tpu.memory_space<vmem>>, vector<16x128xf32>,
    return
  }
  func.func @transform_0(%arg0: i32) -> (i32, i32) {
    %c0_i32 = arith.constant 0 : i32
    %c0_i32_0 = arith.constant 0 : i32
    return %arg0, %c0_i32 : i32, i32
  }
  func.func @transform_1(%arg0: i32) -> (i32, i32) {
    %c0_i32 = arith.constant 0 : i32
    %c0_i32_0 = arith.constant 0 : i32
    %c0_i32_1 = arith.constant 0 : i32
    return %c0_i32, %c0_i32_0 : i32, i32
  }
  func.func @transform_2(%arg0: i32) -> (i32, i32) {
    %c0_i32 = arith.constant 0 : i32
    %c0_i32_0 = arith.constant 0 : i32
    %c0_i32_1 = arith.constant 0 : i32
    return %c0_i32, %c0_i32_0 : i32, i32
  }
  func.func @transform_3(%arg0: i32) -> (i32, i32) {
    %c0_i32 = arith.constant 0 : i32
    %c0_i32_0 = arith.constant 0 : i32
    return %arg0, %c0_i32 : i32, i32
  }
}

</mosaic_0001>

<llo_original>
// kernel: tpu_custom_call.1
$region0: #{tpu_custom_call.1}
  #allocation0 [shape = 'u32[]', space=smem, size = 0x4, offset = 0x4, fixed_abs, tag = 'smem constant byte address 0x4 - core index']
  #allocation1 [shape = 'u32[144,128]{1,0:T(1,128)}', space=vmem, size = 0x12000, scoped, tag = 'internal scratch']
  %s0 = inlined_call_operand.hbm [shape: f32[16,128], index: 0, kind: input, shape index: {}]
  %s1 = inlined_call_operand.vmem [shape: f32[1,128], index: 1, kind: input, shape index: {}]
  %s2 = inlined_call_operand.vmem [shape: f32[1,128], index: 2, kind: input, shape index: {}]
  %s3 = inlined_call_operand.hbm [shape: f32[16,128], index: 3, kind: output, shape index: {}]
  %s4 = sld [smem:[#allocation0]]
  $region26: #{tpu_custom_call.1} parent=0
    _
  %s6 = ssub.s32 1, %s4
  %s7 = scalar_select 0, %s6, %s4
  $region1: #{tpu_custom_call.1} parent=0
    #allocation2 [shape = 'u8[8192]{0}', space=vmem, size = 0x2000, scoped, tag = 'input window, operand 0, single buffered']
    #allocation3 [shape = 's32[1]{0}', space=sflag, size = 0x4, scoped, tag = 'scoped memory for tpu_custom_call.1']
    #allocation4 [shape = 's32[1]{0}', space=sflag, size = 0x4, scoped, tag = 'scoped memory for tpu_custom_call.1']
    #allocation5 [shape = 'u8[8192]{0}', space=vmem, size = 0x2000, scoped, tag = 'output window, operand 0, single buffered']
    %8 = vsyncpa [#allocation3], 0
    %9 = vsyncpa [#allocation4], 0
    // Predicated region
    $region2: #{tpu_custom_call.1} parent=1 // pred_check
      _
    $region3: #{tpu_custom_call.1} parent=1 // pred_check_branch
      %11 = sbr.rel (0) target = $region5
    $region4: #{tpu_custom_call.1} parent=1 // pred_region
      %s13 = ssub.s32 256, 256
      %14 = vsyncadd [#allocation3], %s13
      %s15 = sshll.u32 [#allocation2], 4
      %s16 = int_to_ptr.vmem [resolvable:$true] %s15
      %21 = dma.hbm_to_vmem [thread:$0]  %s0, 256, %s16, [#allocation3], 128, 128, 8
    $region5: #{tpu_custom_call.1} parent=1 // pred_fallthru
      _
    // Predicated region
    $region6: #{tpu_custom_call.1} parent=1 // pred_check
      _
    $region7: #{tpu_custom_call.1} parent=1 // pred_check_branch
      %23 = sbr.rel (0) target = $region9
    $region8: #{tpu_custom_call.1} parent=1 // pred_region
      _
    $region9: #{tpu_custom_call.1} parent=1 // pred_fallthru
      _
    // Predicated region
    $region10: #{tpu_custom_call.1} parent=1 // pred_check
      _
    $region11: #{tpu_custom_call.1} parent=1 // pred_check_branch
      %25 = sbr.rel (0) target = $region13
    $region12: #{tpu_custom_call.1} parent=1 // pred_region
      _
    $region13: #{tpu_custom_call.1} parent=1 // pred_fallthru
      _
    // Predicated region
    $region14: #{tpu_custom_call.1} parent=1 // pred_check
      _
    $region15: #{tpu_custom_call.1} parent=1 // pred_check_branch
      %27 = sbr.rel (0) target = $region17
    $region16: #{tpu_custom_call.1} parent=1 // pred_region
      %28 = dma.done [#allocation3], 256
    $region17: #{tpu_custom_call.1} parent=1 // pred_fallthru
      _
    %v29 = vld [vmem:[#allocation2] sm:$0xff]
    %v30 = vld [vmem:[#allocation2 + $0x8] sm:$0xff]
    %v31 = vlaneseq
    %v32 = vand.u32 %v31, 127
    %vm33 = vcmp.lt.s32.totalorder %v32, 32
    %v34 = vsel %vm33, %v29, 0.0
    %v35 = vsel %vm33, %v30, 0.0
    %36 = vadd.xlane.f32.xlu0 %v34
    %v37 = vpop.xlane.xlu0 %36
    %38 = vadd.xlane.f32.xlu0 %v35
    %v39 = vpop.xlane.xlu0 %38
    %v40 = vmul.f32 %v37, 0.03125
    %v41 = vmul.f32 %v39, 0.03125
    %v42 = vmul.f32 %v34, %v34
    %v43 = vmul.f32 %v35, %v35
    %44 = vadd.xlane.f32.xlu0 %v42
    %v45 = vpop.xlane.xlu0 %44
    %46 = vadd.xlane.f32.xlu0 %v43
    %v47 = vpop.xlane.xlu0 %46
    %v48 = vmul.f32 %v45, 0.03125
    %v49 = vmul.f32 %v47, 0.03125
    %v50 = vmul.f32 %v40, %v40
    %v51 = vmul.f32 %v41, %v41
    %v52 = vsub.f32 %v48, %v50
    %v53 = vsub.f32 %v49, %v51
    %v54 = vmax.f32 %v52, 0.0
    %v55 = vmax.f32 %v53, 0.0
    %v56 = vadd.f32 %v54, 1e-12
    %v57 = vadd.f32 %v55, 1e-12
    %v58 = vrsqrt.pop %v56
    %v59 = vrsqrt.pop %v57
    %v60 = vsub.f32 %v34, %v40
    %v61 = vsub.f32 %v35, %v41
    %v62 = vmul.f32 %v60, %v58
    %v63 = vmul.f32 %v61, %v59
    %v64 = vld [vmem:[%s1] sm:$0x1]
    %v65 = vld [vmem:[%s2] sm:$0x1]
    %v67 = vlaneseq
    %v68 = vshrl.u32 %v67, 7
    %v69 = vsub.s32 0, %v68
    %v70 = vrot.slane %v64, %v69
    %v72 = vmul.f32 %v70, %v62
    %v73 = vmul.f32 %v70, %v63
    %v75 = vlaneseq
    %v76 = vshrl.u32 %v75, 7
    %v77 = vsub.s32 0, %v76
    %v78 = vrot.slane %v65, %v77
    %v80 = vadd.f32 %v72, %v78
    %v81 = vadd.f32 %v73, %v78
    %82 = vst [vmem:[#allocation5] sm:$0xff] %v80
    %83 = vst [vmem:[#allocation5 + $0x8] sm:$0xff] %v81
    // Predicated region
    $region18: #{tpu_custom_call.1} parent=1 // pred_check
      _
    $region19: #{tpu_custom_call.1} parent=1 // pred_check_branch
      %85 = sbr.rel (0) target = $region21
    $region20: #{tpu_custom_call.1} parent=1 // pred_region
      %s87 = ssub.s32 256, 256
      %88 = vsyncadd [#allocation4], %s87
      %s89 = sshll.u32 [#allocation5], 4
      %s90 = int_to_ptr.vmem [resolvable:$true] %s89
      %95 = dma.vmem_to_hbm [thread:$0]  %s90, 256, %s3, [#allocation4], 128, 128, 8
    $region21: #{tpu_custom_call.1} parent=1 // pred_fallthru
      _
    // Predicated region
    $region22: #{tpu_custom_call.1} parent=1 // pred_check
      _
    $region23: #{tpu_custom_call.1} parent=1 // pred_check_branch
      %97 = sbr.rel (0) target = $region25
    $region24: #{tpu_custom_call.1} parent=1 // pred_region
      %98 = dma.done [#allocation4], 256
    $region25: #{tpu_custom_call.1} parent=1 // pred_fallthru
      _
    %99 = vsyncpa [#allocation3], 1
    %100 = vsyncpa [#allocation4], 1

</llo_original>
